<compile_context>
chip_gen: v5e
topology: v5e:2x2
jax: 0.10.0
libtpu: 0.0.40
codegen_flags: <defaults>
</compile_context>

<pallas_src>
import functools

import jax
import jax.numpy as jnp
import numpy as np
from jax import lax
from jax.experimental import pallas as pl
from jax.experimental.pallas import tpu as pltpu


def _attention_kernel(x_ref, wqkv_ref, wo_ref, o_ref, qkv_sc, head_out_sc,
                      *, heads, dim_head):
    """Fused attention forward for one batch element.

    x_ref       : (1, N, D)       bf16 activations
    wqkv_ref    : (D, 3*H*Dh)     bf16, pre-transposed, scale folded into Q slab
    wo_ref      : (H*Dh, D)       bf16, pre-transposed
    o_ref       : (1, N, D)       output (original dtype)
    qkv_sc      : (N, 3*H*Dh)     bf16 VMEM scratch (staged QKV projection)
    head_out_sc : (N, H*Dh)       bf16 VMEM scratch (per-head outputs, lane packed)
    """
    H, Dh = heads, dim_head
    inner = H * Dh

    x = x_ref[0]                                                       # (N, D) bf16

    # One fused QKV projection (single MXU pass, f32 accumulation), then ONE
    # bulk bf16 cast staged to VMEM -> bounds the projection result's lifetime.
    qkv = jnp.dot(x, wqkv_ref[...], preferred_element_type=jnp.float32)
    qkv_sc[...] = qkv.astype(jnp.bfloat16)                             # (N, 3*inner)

    # Per-head scaled-dot-product attention.  H is small & static -> unrolled.
    # NOTE: h*Dh lane offsets are not 128-aligned at ViT dims; see TODO at top
    # (head grouping into 128-lane bundles) for the deployment-scale fix.
    for h in range(H):
        qh = qkv_sc[:, 0 * inner + h * Dh: 0 * inner + (h + 1) * Dh]   # (N, Dh) bf16
        kh = qkv_sc[:, 1 * inner + h * Dh: 1 * inner + (h + 1) * Dh]
        vh = qkv_sc[:, 2 * inner + h * Dh: 2 * inner + (h + 1) * Dh]

        # q @ k^T without materializing a transposed K tile (contract last dims).
        dots = lax.dot_general(qh, kh, (((1,), (1,)), ((), ())),
                               preferred_element_type=jnp.float32)     # (N, N) f32

        # Numerically stable softmax in f32; reciprocal on the (idle) EUP slot.
        dots = dots - jnp.max(dots, axis=-1, keepdims=True)
        e = jnp.exp(dots)
        attn = e * pl.reciprocal(jnp.sum(e, axis=-1, keepdims=True), approx=True)

        # Retire this head's output straight into the staging scratch at lane
        # offset h*Dh -- nothing per-head stays live past this store.
        head_out_sc[:, h * Dh:(h + 1) * Dh] = jnp.dot(
            attn.astype(jnp.bfloat16), vh,
            preferred_element_type=jnp.float32).astype(jnp.bfloat16)

    # Single fused output projection: (N, inner) @ (inner, D).
    # NOTE: for lane-dense (unmasked) output stores keep D a multiple of 128 at
    # deployment shapes; the demo D=32 necessarily uses masked stores.
    o_ref[0] = jnp.dot(head_out_sc[...], wo_ref[...],
                       preferred_element_type=jnp.float32).astype(o_ref.dtype)


def _resident_spec(block_shape, index_map):
    """BlockSpec for a weight that is DMA'd once and stays VMEM-resident.

    Constant index_map -> double-buffering is pure VMEM waste (matters on the
    64 MiB v7x part), so request a single buffer when the API supports it.
    """
    try:
        return pl.BlockSpec(block_shape, index_map, pipeline_mode=pl.Buffered(1))
    except (AttributeError, TypeError):
        return pl.BlockSpec(block_shape, index_map)


def attention_forward(x, w_qkv, w_out, *, heads, dim_head):
    """x: (B, N, D); w_qkv: (3*H*Dh, D); w_out: (D, H*Dh). Returns (B, N, D)."""
    B, N, D = x.shape
    H, Dh = heads, dim_head
    inner = H * Dh
    scale = float(Dh) ** -0.5

    # One-time wrapper-side weight prep (plain XLA glue, outside the kernel):
    #  * fold the 1/sqrt(Dh) scale into the Q rows of W_qkv (in f32),
    #  * pre-transpose to "x @ W" layout so the kernel has no in-kernel .T,
    #  * cast to bf16 for the MXU (accumulation stays f32 inside the kernel).
    w_qkv_scaled = w_qkv.at[:inner].multiply(scale)
    wqkv_t = w_qkv_scaled.T.astype(jnp.bfloat16)                        # (D, 3*inner)
    wo_t = w_out.T.astype(jnp.bfloat16)                                 # (inner, D)
    x_bf16 = x.astype(jnp.bfloat16)

    kernel = functools.partial(_attention_kernel, heads=H, dim_head=Dh)

    return pl.pallas_call(
        kernel,
        out_shape=jax.ShapeDtypeStruct((B, N, D), x.dtype),
        grid_spec=pltpu.PrefetchScalarGridSpec(
            num_scalar_prefetch=0,
            grid=(B,),
            in_specs=[
                pl.BlockSpec((1, N, D), lambda b: (b, 0, 0)),           # x (per batch)
                _resident_spec((D, 3 * inner), lambda b: (0, 0)),       # W_qkv^T (resident)
                _resident_spec((inner, D), lambda b: (0, 0)),           # W_out^T (resident)
            ],
            out_specs=pl.BlockSpec((1, N, D), lambda b: (b, 0, 0)),
            scratch_shapes=[
                pltpu.VMEM((N, 3 * inner), jnp.bfloat16),               # staged QKV
                pltpu.VMEM((N, inner), jnp.bfloat16),                   # packed head outs
            ],
        ),
        compiler_params=pltpu.CompilerParams(
            dimension_semantics=("parallel",),
            vmem_limit_bytes=32 * 1024 * 1024,
        ),
    )(x_bf16, wqkv_t, wo_t)


def attention_reference(x, w_qkv, w_out, *, heads, dim_head):
    """Pure-JAX f32 reference mirroring the PyTorch module (dropout=0.0 -> identity)."""
    B, N, D = x.shape
    H, Dh = heads, dim_head
    inner = H * Dh
    scale = float(Dh) ** -0.5

    qkv = x @ w_qkv.T                                                   # (B, N, 3*inner)
    q, k, v = jnp.split(qkv, 3, axis=-1)

    def to_heads(t):
        return jnp.transpose(t.reshape(B, N, H, Dh), (0, 2, 1, 3))      # (B, H, N, Dh)

    q, k, v = map(to_heads, (q, k, v))
    dots = jnp.einsum("bhid,bhjd->bhij", q, k) * scale
    attn = jax.nn.softmax(dots, axis=-1)
    out = jnp.einsum("bhij,bhjd->bhid", attn, v)                        # (B, H, N, Dh)
    out = jnp.transpose(out, (0, 2, 1, 3)).reshape(B, N, inner)
    return out @ w_out.T


if __name__ == "__main__":
    # Small shapes consistent with the module's forward.
    B, N, D = 2, 8, 32
    heads, dim_head = 4, 16
    inner = heads * dim_head

    key = jax.random.PRNGKey(0)
    kx, kqkv, kout = jax.random.split(key, 3)

    x = jax.random.normal(kx, (B, N, D), dtype=jnp.float32)
    # PyTorch Linear convention: (out_features, in_features), no bias.
    w_qkv = jax.random.normal(kqkv, (3 * inner, D), dtype=jnp.float32) * (D ** -0.5)
    w_out = jax.random.normal(kout, (D, inner), dtype=jnp.float32) * (inner ** -0.5)

    y = attention_forward(x, w_qkv, w_out, heads=heads, dim_head=dim_head)
    y = jax.block_until_ready(y)

    y_ref = attention_reference(x, w_qkv, w_out, heads=heads, dim_head=dim_head)
    # bf16 MXU inputs + approx EUP reciprocal in the softmax denominator ->
    # loosened tolerance vs. the f32 reference (inference-grade; use exact
    # reciprocal / f32 scores if reused for training).
    np.testing.assert_allclose(np.asarray(y), np.asarray(y_ref), rtol=5e-2, atol=5e-2)

    print("KERNEL_OK")
</pallas_src>

<mosaic_0001>
module attributes {stable_mosaic.version = 11 : i64} {
  func.func @_attention_kernel(%arg0: i32, %arg1: memref<1x8x32xbf16, #tpu.memory_space<vmem>>, %arg2: memref<32x192xbf16, #tpu.memory_space<vmem>>, %arg3: memref<64x32xbf16, #tpu.memory_space<vmem>>, %arg4: memref<1x8x32xf32, #tpu.memory_space<vmem>>, %arg5: memref<8x192xbf16, #tpu.memory_space<vmem>>, %arg6: memref<8x64xbf16, #tpu.memory_space<vmem>>) attributes {dimension_semantics = [#tpu.dimension_semantics<parallel>], iteration_bounds = array<i64: 2>, scalar_prefetch = 0 : i64, scratch_operands = 2 : i64, tpu.core_type = #tpu.core_type<tc>, window_params = [{transform_indices = @transform_0, window_bounds = array<i64: 1, 8, 32>}, {pipeline_mode = #tpu.pipeline_mode<synchronous>, transform_indices = @transform_1, window_bounds = array<i64: 32, 192>}, {pipeline_mode = #tpu.pipeline_mode<synchronous>, transform_indices = @transform_2, window_bounds = array<i64: 64, 32>}, {transform_indices = @transform_3, window_bounds = array<i64: 1, 8, 32>}]} {
    %c0 = arith.constant 0 : index
    %c0_0 = arith.constant 0 : index
    %c0_1 = arith.constant 0 : index
    %0 = vector.load %arg1[%c0, %c0_0, %c0_1] : memref<1x8x32xbf16, #tpu.memory_space<vmem>>, vector<1x8x32xbf16>
    %1 = vector.shape_cast %0 : vector<1x8x32xbf16> to vector<8x32xbf16>
    %c0_2 = arith.constant 0 : index
    %c0_3 = arith.constant 0 : index
    %2 = vector.load %arg2[%c0_2, %c0_3] : memref<32x192xbf16, #tpu.memory_space<vmem>>, vector<32x192xbf16>
    %cst = arith.constant dense<0.000000e+00> : vector<8x192xf32>
    %3 = tpu.matmul %1, %2, %cst {dimension_numbers = #tpu.dot_dimension_numbers<[1], [0], [0], [1], [0, 0, 1, 1], [], []>} : vector<8x32xbf16>, vector<32x192xbf16>, vector<8x192xf32> -> vector<8x192xf32>
    %4 = arith.truncf %3 : vector<8x192xf32> to vector<8x192xbf16>
    %c0_4 = arith.constant 0 : index
    %c0_5 = arith.constant 0 : index
    %5 = vector.load %arg5[%c0_4, %c0_5] : memref<8x192xbf16, #tpu.memory_space<vmem>>, vector<8x192xbf16>
    tpu.vector_store %arg5[%c0_4, %c0_5], %4 {strides = array<i32>} : memref<8x192xbf16, #tpu.memory_space<vmem>>, vector<8x192xbf16>,
    %c0_6 = arith.constant 0 : index
    %c0_7 = arith.constant 0 : index
    %6 = vector.load %arg5[%c0_6, %c0_7] : memref<8x192xbf16, #tpu.memory_space<vmem>>, vector<8x16xbf16>
    %c0_8 = arith.constant 0 : index
    %c64 = arith.constant 64 : index
    %7 = vector.load %arg5[%c0_8, %c64] : memref<8x192xbf16, #tpu.memory_space<vmem>>, vector<8x16xbf16>
    %c0_9 = arith.constant 0 : index
    %c128 = arith.constant 128 : index
    %8 = vector.load %arg5[%c0_9, %c128] : memref<8x192xbf16, #tpu.memory_space<vmem>>, vector<8x16xbf16>
    %cst_10 = arith.constant dense<0.000000e+00> : vector<8x8xf32>
    %9 = tpu.matmul %6, %7, %cst_10 {dimension_numbers = #tpu.dot_dimension_numbers<[1], [1], [0], [0], [0, 0, 1, 0], [], []>} : vector<8x16xbf16>, vector<8x16xbf16>, vector<8x8xf32> -> vector<8x8xf32>
    %cst_11 = arith.constant dense<0xFF800000> : vector<8xf32>
    %10 = vector.multi_reduction <maximumf>, %9, %cst_11 [1] : vector<8x8xf32> to vector<8xf32>
    %11 = vector.shape_cast %10 : vector<8xf32> to vector<8x1xf32>
    %12 = vector.broadcast %11 : vector<8x1xf32> to vector<8x8xf32>
    %13 = arith.subf %9, %12 : vector<8x8xf32>
    %14 = math.exp %13 : vector<8x8xf32>
    %cst_12 = arith.constant dense<0.000000e+00> : vector<8xf32>
    %15 = vector.multi_reduction <add>, %14, %cst_12 [1] : vector<8x8xf32> to vector<8xf32>
    %16 = vector.shape_cast %15 : vector<8xf32> to vector<8x1xf32>
    %17 = tpu.reciprocal %16 {approx = true} : vector<8x1xf32> -> vector<8x1xf32>
    %18 = vector.broadcast %17 : vector<8x1xf32> to vector<8x8xf32>
    %19 = arith.mulf %14, %18 : vector<8x8xf32>
    %20 = arith.truncf %19 : vector<8x8xf32> to vector<8x8xbf16>
    %cst_13 = arith.constant dense<0.000000e+00> : vector<8x16xf32>
    %21 = tpu.matmul %20, %8, %cst_13 {dimension_numbers = #tpu.dot_dimension_numbers<[1], [0], [0], [1], [0, 0, 1, 1], [], []>} : vector<8x8xbf16>, vector<8x16xbf16>, vector<8x16xf32> -> vector<8x16xf32>
    %22 = arith.truncf %21 : vector<8x16xf32> to vector<8x16xbf16>
    %c0_14 = arith.constant 0 : index
    %c0_15 = arith.constant 0 : index
    %23 = vector.load %arg6[%c0_14, %c0_15] : memref<8x64xbf16, #tpu.memory_space<vmem>>, vector<8x16xbf16>
    tpu.vector_store %arg6[%c0_14, %c0_15], %22 {strides = array<i32>} : memref<8x64xbf16, #tpu.memory_space<vmem>>, vector<8x16xbf16>,
    %c0_16 = arith.constant 0 : index
    %c16 = arith.constant 16 : index
    %24 = vector.load %arg5[%c0_16, %c16] : memref<8x192xbf16, #tpu.memory_space<vmem>>, vector<8x16xbf16>
    %c0_17 = arith.constant 0 : index
    %c80 = arith.constant 80 : index
    %25 = vector.load %arg5[%c0_17, %c80] : memref<8x192xbf16, #tpu.memory_space<vmem>>, vector<8x16xbf16>
    %c0_18 = arith.constant 0 : index
    %c144 = arith.constant 144 : index
    %26 = vector.load %arg5[%c0_18, %c144] : memref<8x192xbf16, #tpu.memory_space<vmem>>, vector<8x16xbf16>
    %cst_19 = arith.constant dense<0.000000e+00> : vector<8x8xf32>
    %27 = tpu.matmul %24, %25, %cst_19 {dimension_numbers = #tpu.dot_dimension_numbers<[1], [1], [0], [0], [0, 0, 1, 0], [], []>} : vector<8x16xbf16>, vector<8x16xbf16>, vector<8x8xf32> -> vector<8x8xf32>
    %cst_20 = arith.constant dense<0xFF800000> : vector<8xf32>
    %28 = vector.multi_reduction <maximumf>, %27, %cst_20 [1] : vector<8x8xf32> to vector<8xf32>
    %29 = vector.shape_cast %28 : vector<8xf32> to vector<8x1xf32>
    %30 = vector.broadcast %29 : vector<8x1xf32> to vector<8x8xf32>
    %31 = arith.subf %27, %30 : vector<8x8xf32>
    %32 = math.exp %31 : vector<8x8xf32>
    %cst_21 = arith.constant dense<0.000000e+00> : vector<8xf32>
    %33 = vector.multi_reduction <add>, %32, %cst_21 [1] : vector<8x8xf32> to vector<8xf32>
    %34 = vector.shape_cast %33 : vector<8xf32> to vector<8x1xf32>
    %35 = tpu.reciprocal %34 {approx = true} : vector<8x1xf32> -> vector<8x1xf32>
    %36 = vector.broadcast %35 : vector<8x1xf32> to vector<8x8xf32>
    %37 = arith.mulf %32, %36 : vector<8x8xf32>
    %38 = arith.truncf %37 : vector<8x8xf32> to vector<8x8xbf16>
    %cst_22 = arith.constant dense<0.000000e+00> : vector<8x16xf32>
    %39 = tpu.matmul %38, %26, %cst_22 {dimension_numbers = #tpu.dot_dimension_numbers<[1], [0], [0], [1], [0, 0, 1, 1], [], []>} : vector<8x8xbf16>, vector<8x16xbf16>, vector<8x16xf32> -> vector<8x16xf32>
    %40 = arith.truncf %39 : vector<8x16xf32> to vector<8x16xbf16>
    %c0_23 = arith.constant 0 : index
    %c16_24 = arith.constant 16 : index
    %41 = vector.load %arg6[%c0_23, %c16_24] : memref<8x64xbf16, #tpu.memory_space<vmem>>, vector<8x16xbf16>
    tpu.vector_store %arg6[%c0_23, %c16_24], %40 {strides = array<i32>} : memref<8x64xbf16, #tpu.memory_space<vmem>>, vector<8x16xbf16>,
    %c0_25 = arith.constant 0 : index
    %c32 = arith.constant 32 : index
    %42 = vector.load %arg5[%c0_25, %c32] : memref<8x192xbf16, #tpu.memory_space<vmem>>, vector<8x16xbf16>
    %c0_26 = arith.constant 0 : index
    %c96 = arith.constant 96 : index
    %43 = vector.load %arg5[%c0_26, %c96] : memref<8x192xbf16, #tpu.memory_space<vmem>>, vector<8x16xbf16>
    %c0_27 = arith.constant 0 : index
    %c160 = arith.constant 160 : index
    %44 = vector.load %arg5[%c0_27, %c160] : memref<8x192xbf16, #tpu.memory_space<vmem>>, vector<8x16xbf16>
    %cst_28 = arith.constant dense<0.000000e+00> : vector<8x8xf32>
    %45 = tpu.matmul %42, %43, %cst_28 {dimension_numbers = #tpu.dot_dimension_numbers<[1], [1], [0], [0], [0, 0, 1, 0], [], []>} : vector<8x16xbf16>, vector<8x16xbf16>, vector<8x8xf32> -> vector<8x8xf32>
    %cst_29 = arith.constant dense<0xFF800000> : vector<8xf32>
    %46 = vector.multi_reduction <maximumf>, %45, %cst_29 [1] : vector<8x8xf32> to vector<8xf32>
    %47 = vector.shape_cast %46 : vector<8xf32> to vector<8x1xf32>
    %48 = vector.broadcast %47 : vector<8x1xf32> to vector<8x8xf32>
    %49 = arith.subf %45, %48 : vector<8x8xf32>
    %50 = math.exp %49 : vector<8x8xf32>
    %cst_30 = arith.constant dense<0.000000e+00> : vector<8xf32>
    %51 = vector.multi_reduction <add>, %50, %cst_30 [1] : vector<8x8xf32> to vector<8xf32>
    %52 = vector.shape_cast %51 : vector<8xf32> to vector<8x1xf32>
    %53 = tpu.reciprocal %52 {approx = true} : vector<8x1xf32> -> vector<8x1xf32>
    %54 = vector.broadcast %53 : vector<8x1xf32> to vector<8x8xf32>
    %55 = arith.mulf %50, %54 : vector<8x8xf32>
    %56 = arith.truncf %55 : vector<8x8xf32> to vector<8x8xbf16>
    %cst_31 = arith.constant dense<0.000000e+00> : vector<8x16xf32>
    %57 = tpu.matmul %56, %44, %cst_31 {dimension_numbers = #tpu.dot_dimension_numbers<[1], [0], [0], [1], [0, 0, 1, 1], [], []>} : vector<8x8xbf16>, vector<8x16xbf16>, vector<8x16xf32> -> vector<8x16xf32>
    %58 = arith.truncf %57 : vector<8x16xf32> to vector<8x16xbf16>
    %c0_32 = arith.constant 0 : index
    %c32_33 = arith.constant 32 : index
    %59 = vector.load %arg6[%c0_32, %c32_33] : memref<8x64xbf16, #tpu.memory_space<vmem>>, vector<8x16xbf16>
    tpu.vector_store %arg6[%c0_32, %c32_33], %58 {strides = array<i32>} : memref<8x64xbf16, #tpu.memory_space<vmem>>, vector<8x16xbf16>,
    %c0_34 = arith.constant 0 : index
    %c48 = arith.constant 48 : index
    %60 = vector.load %arg5[%c0_34, %c48] : memref<8x192xbf16, #tpu.memory_space<vmem>>, vector<8x16xbf16>
    %c0_35 = arith.constant 0 : index
    %c112 = arith.constant 112 : index
    %61 = vector.load %arg5[%c0_35, %c112] : memref<8x192xbf16, #tpu.memory_space<vmem>>, vector<8x16xbf16>
    %c0_36 = arith.constant 0 : index
    %c176 = arith.constant 176 : index
    %62 = vector.load %arg5[%c0_36, %c176] : memref<8x192xbf16, #tpu.memory_space<vmem>>, vector<8x16xbf16>
    %cst_37 = arith.constant dense<0.000000e+00> : vector<8x8xf32>
    %63 = tpu.matmul %60, %61, %cst_37 {dimension_numbers = #tpu.dot_dimension_numbers<[1], [1], [0], [0], [0, 0, 1, 0], [], []>} : vector<8x16xbf16>, vector<8x16xbf16>, vector<8x8xf32> -> vector<8x8xf32>
    %cst_38 = arith.constant dense<0xFF800000> : vector<8xf32>
    %64 = vector.multi_reduction <maximumf>, %63, %cst_38 [1] : vector<8x8xf32> to vector<8xf32>
    %65 = vector.shape_cast %64 : vector<8xf32> to vector<8x1xf32>
    %66 = vector.broadcast %65 : vector<8x1xf32> to vector<8x8xf32>
    %67 = arith.subf %63, %66 : vector<8x8xf32>
    %68 = math.exp %67 : vector<8x8xf32>
    %cst_39 = arith.constant dense<0.000000e+00> : vector<8xf32>
    %69 = vector.multi_reduction <add>, %68, %cst_39 [1] : vector<8x8xf32> to vector<8xf32>
    %70 = vector.shape_cast %69 : vector<8xf32> to vector<8x1xf32>
    %71 = tpu.reciprocal %70 {approx = true} : vector<8x1xf32> -> vector<8x1xf32>
    %72 = vector.broadcast %71 : vector<8x1xf32> to vector<8x8xf32>
    %73 = arith.mulf %68, %72 : vector<8x8xf32>
    %74 = arith.truncf %73 : vector<8x8xf32> to vector<8x8xbf16>
    %cst_40 = arith.constant dense<0.000000e+00> : vector<8x16xf32>
    %75 = tpu.matmul %74, %62, %cst_40 {dimension_numbers = #tpu.dot_dimension_numbers<[1], [0], [0], [1], [0, 0, 1, 1], [], []>} : vector<8x8xbf16>, vector<8x16xbf16>, vector<8x16xf32> -> vector<8x16xf32>
    %76 = arith.truncf %75 : vector<8x16xf32> to vector<8x16xbf16>
    %c0_41 = arith.constant 0 : index
    %c48_42 = arith.constant 48 : index
    %77 = vector.load %arg6[%c0_41, %c48_42] : memref<8x64xbf16, #tpu.memory_space<vmem>>, vector<8x16xbf16>
    tpu.vector_store %arg6[%c0_41, %c48_42], %76 {strides = array<i32>} : memref<8x64xbf16, #tpu.memory_space<vmem>>, vector<8x16xbf16>,
    %c0_43 = arith.constant 0 : index
    %c0_44 = arith.constant 0 : index
    %78 = vector.load %arg6[%c0_43, %c0_44] : memref<8x64xbf16, #tpu.memory_space<vmem>>, vector<8x64xbf16>
    %c0_45 = arith.constant 0 : index
    %c0_46 = arith.constant 0 : index
    %79 = vector.load %arg3[%c0_45, %c0_46] : memref<64x32xbf16, #tpu.memory_space<vmem>>, vector<64x32xbf16>
    %cst_47 = arith.constant dense<0.000000e+00> : vector<8x32xf32>
    %80 = tpu.matmul %78, %79, %cst_47 {dimension_numbers = #tpu.dot_dimension_numbers<[1], [0], [0], [1], [0, 0, 1, 1], [], []>} : vector<8x64xbf16>, vector<64x32xbf16>, vector<8x32xf32> -> vector<8x32xf32>
    %c0_48 = arith.constant 0 : index
    %c0_49 = arith.constant 0 : index
    %c0_50 = arith.constant 0 : index
    %81 = vector.load %arg4[%c0_48, %c0_49, %c0_50] : memref<1x8x32xf32, #tpu.memory_space<vmem>>, vector<1x8x32xf32>
    %82 = vector.shape_cast %81 : vector<1x8x32xf32> to vector<8x32xf32>
    %83 = vector.shape_cast %80 : vector<8x32xf32> to vector<1x8x32xf32>
    tpu.vector_store %arg4[%c0_48, %c0_49, %c0_50], %83 {strides = array<i32>} : memref<1x8x32xf32, #tpu.memory_space<vmem>>, vector<1x8x32xf32>,
    return
  }
  func.func @transform_0(%arg0: i32) -> (i32, i32, i32) {
    %c0_i32 = arith.constant 0 : i32
    %c0_i32_0 = arith.constant 0 : i32
    %c0_i32_1 = arith.constant 0 : i32
    return %arg0, %c0_i32, %c0_i32_0 : i32, i32, i32
  }
  func.func @transform_1(%arg0: i32) -> (i32, i32) {
    %c0_i32 = arith.constant 0 : i32
    %c0_i32_0 = arith.constant 0 : i32
    %c0_i32_1 = arith.constant 0 : i32
    return %c0_i32, %c0_i32_0 : i32, i32
  }
  func.func @transform_2(%arg0: i32) -> (i32, i32) {
    %c0_i32 = arith.constant 0 : i32
    %c0_i32_0 = arith.constant 0 : i32
    %c0_i32_1 = arith.constant 0 : i32
    return %c0_i32, %c0_i32_0 : i32, i32
  }
  func.func @transform_3(%arg0: i32) -> (i32, i32, i32) {
    %c0_i32 = arith.constant 0 : i32
    %c0_i32_0 = arith.constant 0 : i32
    %c0_i32_1 = arith.constant 0 : i32
    return %arg0, %c0_i32, %c0_i32_0 : i32, i32, i32
  }
}

</mosaic_0001>

<llo_original>
// kernel: tpu_custom_call.1
$region0: #{tpu_custom_call.1}
  #allocation0 [shape = 'u32[]', space=smem, size = 0x4, offset = 0x4, fixed_abs, tag = 'smem constant byte address 0x4 - core index']
  #allocation1 [shape = 'u32[72,128]{1,0:T(1,128)}', space=vmem, size = 0x9000, scoped, tag = 'internal scratch']
  #allocation2 [shape = 'bf16[8,192]{1,0:T(8,128)(2,1)}', space=vmem, size = 0x1000, scoped, tag = 'scratch operand']
  #allocation3 [shape = 'bf16[8,64]{1,0:T(8,128)(2,1)}', space=vmem, size = 0x800, scoped, tag = 'scratch operand']
  %s0 = inlined_call_operand.vmem [shape: bf16[2,8,32], index: 0, kind: input, shape index: {}]
  %s1 = inlined_call_operand.vmem [shape: bf16[32,192], index: 1, kind: input, shape index: {}]
  %s2 = inlined_call_operand.vmem [shape: bf16[64,32], index: 2, kind: input, shape index: {}]
  %s3 = inlined_call_operand.hbm [shape: f32[2,8,32], index: 3, kind: output, shape index: {}]
  %s4 = sld [smem:[#allocation0]]
  $region45: #{tpu_custom_call.1} parent=0
    _
  %s6 = ssub.s32 1, %s4
  %s7 = scalar_select 0, %s6, %s4
  $region1: #{tpu_custom_call.1} parent=0
    #allocation4 [shape = 'u8[8192]{0}', space=vmem, size = 0x2000, scoped, tag = 'output window, operand 0']
    #allocation5 [shape = 's32[2]{0}', space=sflag, size = 0x8, scoped, tag = 'scoped memory for tpu_custom_call.1']
    %8 = vsyncpa [#allocation5], 0
    %s9 = scalar_lea.sflag [#allocation5], 1
    %10 = vsyncpa %s9, 0
    loop: start=0, step=1, limit=4
    $region2: #{tpu_custom_call.1} parent=1 // loop_pre_header
      _
    $region3: #{tpu_custom_call.1} parent=1 // loop_header
      %s12 = sphi 0, %s16
      %p13 = scmp.ge.s32.totalorder %s12, 4
      %s22 = sphi 0, %s24
      %s25 = sphi 0, %s22
      %s26 = sphi 0, %s25
      %s42 = sphi 0, %s26
      %s46 = sphi 0, %s46
      %s48 = sphi 0, %s46
      %s49 = sphi 0, %s48
      %s63 = sphi 0, %s49
      %s67 = sphi 0, %s67
      %s69 = sphi 0, %s67
      %s70 = sphi 0, %s69
      %s84 = sphi 0, %s70
      %s90 = sphi 0, %s92
      %s93 = sphi 0, %s90
      %s94 = sphi 0, %s93
      %s110 = sphi 0, %s94
    $region4: #{tpu_custom_call.1} parent=1 // loop_header_branch
      %15 = sbr.rel (%p13) target = $region8
    $region5: #{tpu_custom_call.1} parent=1 // loop_body
      %s17 = ssub.s32 %s12, 1
      %s18 = ssub.s32 %s12, 2
      %s19 = sadd.s32 %s12, 1
      %s20 = ssub.s32 %s12, %s19
      %p21 = scmp.eq.s32.totalorder %s20, 0
      %s23 = sadd.s32 %s22, 1
      %s24 = scalar_select %p21, %s22, %s23
      %p27 = pneg %p21
      %p28 = scmp.eq.s32.totalorder %s12, 1
      %p29 = por %p27, %p28
      %p30 = scmp.ne.s32.totalorder %s22, %s25
      %p31 = scmp.eq.s32.totalorder %s12, 0
      %p32 = por %p30, %p31
      %p33 = scmp.ne.s32.totalorder %s22, %s25
      %p34 = scmp.eq.s32.totalorder %s17, 1
      %p35 = por %p33, %p34
      %p36 = scmp.ne.s32.totalorder %s25, %s26
      %p37 = scmp.eq.s32.totalorder %s17, 0
      %p38 = por %p36, %p37
      %p39 = scmp.ne.s32.totalorder %s25, %s26
      %p40 = scmp.eq.s32.totalorder %s18, 1
      %p41 = por %p39, %p40
      %p43 = scmp.ne.s32.totalorder %s26, %s42
      %p44 = scmp.eq.s32.totalorder %s18, 0
      %p45 = por %p43, %p44
      %s47 = sadd.s32 %s46, 1
      %p50 = scmp.eq.s32.totalorder %s12, 1
      %p51 = scmp.ne.s32.totalorder %s46, %s48
      %p52 = scmp.eq.s32.totalorder %s12, 0
      %p53 = por %p51, %p52
      %p54 = scmp.ne.s32.totalorder %s46, %s48
      %p55 = scmp.eq.s32.totalorder %s17, 1
      %p56 = por %p54, %p55
      %p57 = scmp.ne.s32.totalorder %s48, %s49
      %p58 = scmp.eq.s32.totalorder %s17, 0
      %p59 = por %p57, %p58
      %p60 = scmp.ne.s32.totalorder %s48, %s49
      %p61 = scmp.eq.s32.totalorder %s18, 1
      %p62 = por %p60, %p61
      %p64 = scmp.ne.s32.totalorder %s49, %s63
      %p65 = scmp.eq.s32.totalorder %s18, 0
      %p66 = por %p64, %p65
      %s68 = sadd.s32 %s67, 1
      %p71 = scmp.eq.s32.totalorder %s12, 1
      %p72 = scmp.ne.s32.totalorder %s67, %s69
      %p73 = scmp.eq.s32.totalorder %s12, 0
      %p74 = por %p72, %p73
      %p75 = scmp.ne.s32.totalorder %s67, %s69
      %p76 = scmp.eq.s32.totalorder %s17, 1
      %p77 = por %p75, %p76
      %p78 = scmp.ne.s32.totalorder %s69, %s70
      %p79 = scmp.eq.s32.totalorder %s17, 0
      %p80 = por %p78, %p79
      %p81 = scmp.ne.s32.totalorder %s69, %s70
      %p82 = scmp.eq.s32.totalorder %s18, 1
      %p83 = por %p81, %p82
      %p85 = scmp.ne.s32.totalorder %s70, %s84
      %p86 = scmp.eq.s32.totalorder %s18, 0
      %p87 = por %p85, %p86
      %s88 = ssub.s32 %s12, %s19
      %p89 = scmp.eq.s32.totalorder %s88, 0
      %s91 = sadd.s32 %s90, 1
      %s92 = scalar_select %p89, %s90, %s91
      %p95 = pneg %p89
      %p96 = scmp.eq.s32.totalorder %s12, 1
      %p97 = por %p95, %p96
      %p98 = scmp.ne.s32.totalorder %s90, %s93
      %p99 = scmp.eq.s32.totalorder %s12, 0
      %p100 = por %p98, %p99
      %p101 = scmp.ne.s32.totalorder %s90, %s93
      %p102 = scmp.eq.s32.totalorder %s17, 1
      %p103 = por %p101, %p102
      %p104 = scmp.ne.s32.totalorder %s93, %s94
      %p105 = scmp.eq.s32.totalorder %s17, 0
      %p106 = por %p104, %p105
      %p107 = scmp.ne.s32.totalorder %s93, %s94
      %p108 = scmp.eq.s32.totalorder %s18, 1
      %p109 = por %p107, %p108
      %p111 = scmp.ne.s32.totalorder %s94, %s110
      %p112 = scmp.eq.s32.totalorder %s18, 0
      %p113 = por %p111, %p112
      %p114 = scmp.le.s32.totalorder 1, %s12
      %p115 = scmp.lt.s32.totalorder %s12, 3
      %p116 = pnand %p114, %p115
      %p117 = pneg %p116
      // Predicated region
      $region9: #{tpu_custom_call.1} parent=5 // pred_check
        _
      $region10: #{tpu_custom_call.1} parent=5 // pred_check_branch
        %119 = sbr.rel (%p116) target = $region12
      $region11: #{tpu_custom_call.1} parent=5 // pred_region
        %s120 = ssub.s32 %s12, 1
        // Predicated region
        $region13: #{tpu_custom_call.1} parent=11 // pred_check
          %p121 = pneg %p59
        $region14: #{tpu_custom_call.1} parent=11 // pred_check_branch
          %123 = sbr.rel (%p121) target = $region16
        $region15: #{tpu_custom_call.1} parent=11 // pred_region
          _
        $region16: #{tpu_custom_call.1} parent=11 // pred_fallthru
          _
        // Predicated region
        $region17: #{tpu_custom_call.1} parent=11 // pred_check
          %p124 = pneg %p80
        $region18: #{tpu_custom_call.1} parent=11 // pred_check_branch
          %126 = sbr.rel (%p124) target = $region20
        $region19: #{tpu_custom_call.1} parent=11 // pred_region
          _
        $region20: #{tpu_custom_call.1} parent=11 // pred_fallthru
          _
      $region12: #{tpu_custom_call.1} parent=5 // pred_fallthru
        _
      %p127 = scmp.lt.s32.totalorder %s12, 2
      // Predicated region
      $region21: #{tpu_custom_call.1} parent=5 // pred_check
        %p128 = pneg %p127
      $region22: #{tpu_custom_call.1} parent=5 // pred_check_branch
        %130 = sbr.rel (%p128) target = $region24
      $region23: #{tpu_custom_call.1} parent=5 // pred_region
        // Predicated region
        $region25: #{tpu_custom_call.1} parent=23 // pred_check
          %p131 = pneg %p32
        $region26: #{tpu_custom_call.1} parent=23 // pred_check_branch
          %133 = sbr.rel (%p131) target = $region28
        $region27: #{tpu_custom_call.1} parent=23 // pred_region
          %p134 = scmp.lt.s32.totalorder %s12, 1
          %s135 = scalar_select %p134, %s12, 1
          %s136 = smul.addr %s135, 4
          %s137 = scalar_lea.vmem %s0, %s136
        $region28: #{tpu_custom_call.1} parent=23 // pred_fallthru
          _
      $region24: #{tpu_custom_call.1} parent=5 // pred_fallthru
        _
      %p138 = scmp.le.s32.totalorder 1, %s12
      %p139 = scmp.lt.s32.totalorder %s12, 3
      %p140 = pnand %p138, %p139
      %p141 = pneg %p140
      // Predicated region
      $region29: #{tpu_custom_call.1} parent=5 // pred_check
        _
      $region30: #{tpu_custom_call.1} parent=5 // pred_check_branch
        %143 = sbr.rel (%p140) target = $region32
      $region31: #{tpu_custom_call.1} parent=5 // pred_region
        %s144 = ssub.s32 %s12, 1
        %p145 = scmp.lt.s32.totalorder %s17, 1
        %s146 = scalar_select %p145, %s17, 1
        %s147 = smul.addr %s146, 4
        %s148 = scalar_lea.vmem %s0, %s147
        %p149 = pneg %p38
        %p150 = pneg %p35
        %p151 = pneg %p59
        %p152 = pneg %p56
        %p153 = pneg %p80
        %p154 = pneg %p77
        %p155 = pneg %p106
        %p156 = pneg %p103
        %s157 = sand.u32 %s93, 1
        %s158 = scalar_lea.sflag [#allocation5], %s157
        %s159 = sand.u32 %s93, 1
        %s160 = smul.addr %s159, 8
        %s161 = scalar_lea.vmem [#allocation4], %s160
        %p162 = scmp.lt.s32.totalorder %s17, 1
        %s163 = scalar_select %p162, %s17, 1
        %s164 = smul.addr %s163, 4
        %s165 = scalar_lea.vmem %s0, %s164
        %v167 = vld [vmem:[%s165] sm:$0xf]
        %v168 = vld [vmem:[%s1] sm:$0xff]
        %v169 = vld [vmem:[%s1 + $0x8] sm:$0xff]
        %v170 = vld [vmem:[%s1 + $0x10] sm:$0xff]
        %v171 = vld [vmem:[%s1 + $0x18] sm:$0xff]
        %v176 = vunpack.c.l.b16 %v168
        %v177 = vunpack.c.h.b16 %v168
        %v178 = vunpack.c.l.b16 %v169
        %v179 = vunpack.c.h.b16 %v169
        %v180 = vunpack.c.l.b16 %v170
        %v181 = vunpack.c.h.b16 %v170
        %v182 = vunpack.c.l.b16 %v171
        %v183 = vunpack.c.h.b16 %v171
        %v184 = vpack.c.b16 %v178, %v176
        %v185 = vpack.c.b16 %v179, %v177
        %v186 = vpack.c.b16 %v182, %v180
        %v187 = vpack.c.b16 %v183, %v181
        %vm192 = vcmask 261120
        %v194 = vsel %vm192, %v167, 0
        %196 = vmatpush.bf16.msra.mxu0 0
        %197 = vmatpush.bf16.msra.mxu0 0
        %198 = vmatpush.bf16.msra.mxu0 0
        %199 = vmatpush.bf16.msra.mxu0 0
        %200 = vmatpush.bf16.msra.mxu0 0
        %201 = vmatpush.bf16.msra.mxu0 0
        %202 = vmatpush.bf16.msra.mxu0 %v186
        %203 = vmatpush.bf16.msra.mxu0 %v184
        %204 = vmatmul.bf16.gmra.mxu0 %v194
        %v205 = vpop.f32.mrf.mxu0
        %v206 = vadd.f32 0.0, %v205
        %v207 = vpop.f32.mrf.mxu0
        %208 = vdwg.mxu0
        %209 = vmatpush.bf16.msra.mxu0 0
        %210 = vmatpush.bf16.msra.mxu0 0
        %211 = vmatpush.bf16.msra.mxu0 0
        %212 = vmatpush.bf16.msra.mxu0 0
        %213 = vmatpush.bf16.msra.mxu0 0
        %214 = vmatpush.bf16.msra.mxu0 0
        %215 = vmatpush.bf16.msra.mxu0 %v187
        %216 = vmatpush.bf16.msra.mxu0 %v185
        %217 = vmatmul.bf16.gmra.mxu0 %v194
        %v218 = vpop.f32.mrf.mxu0
        %v219 = vadd.f32 0.0, %v218
        %v220 = vpop.f32.mrf.mxu0
        %221 = vdwg.mxu0
        %v222 = vpack.c.bf16 %v219, %v206
        %vm223 = vcmask 1043456
        %vm224 = vcmask 523268
        %vm225 = vmor %vm224, %vm223
        %226 = vst.msk [vmem:[#allocation2] sm:$0xff] %vm225, %v222
        %v227 = vld [vmem:[#allocation2] sm:$0xf]
        %v228 = vld [vmem:[#allocation2 + $0x4] sm:$0xf]
        %v230 = vunpack.c.l.b16 %v227
        %v231 = vpack.c.b16 %v230, %v230
        %232 = vrot.lane.b32.xlu0 %v231, 64
        %v233 = vpop.permute.xlu0 %232
        %vm234 = vcmask 130048
        %v236 = vsel %vm234, %v227, 0
        %v239 = vsel %vm234, %v233, 0
        %241 = vmatpush.bf16.xpose.msra.mxu0 0
        %242 = vmatpush.bf16.xpose.msra.mxu0 0
        %243 = vmatpush.bf16.xpose.msra.mxu0 0
        %244 = vmatpush.bf16.xpose.msra.mxu0 0
        %245 = vmatpush.bf16.xpose.msra.mxu0 0
        %246 = vmatpush.bf16.xpose.msra.mxu0 0
        %247 = vmatpush.bf16.xpose.msra.mxu0 0
        %248 = vmatpush.bf16.xpose.msra.mxu0 %v239
        %249 = vmatmul.bf16.gmra.mxu0 %v236
        %v250 = vpop.f32.mrf.mxu0
        %v251 = vadd.f32 0.0, %v250
        %v252 = vpop.f32.mrf.mxu0
        %253 = vdwg.mxu0
        %vm254 = vcmask 64512
        %v255 = vsel %vm254, %v251, -inf
        %256 = vmax.xlane.f32.xlu0 %v255
        %v257 = vpop.xlane.xlu0 %256
        %v258 = vsub.f32 %v251, %v257
        %v259 = vmul.f32 %v258, 1.442695
        %v260 = vpow.pop %v259
        %v261 = vsel %vm254, %v260, 0.0
        %262 = vadd.xlane.f32.xlu0 %v261
        %v263 = vpop.xlane.xlu0 %262
        %v264 = vrcp.pop %v263
        %v265 = vmul.f32 %v260, %v264
        %v266 = vpack.c.bf16 %v265, %v265
        %v268 = vsel %vm254, %v266, 0
        %v271 = vsel %vm223, %v228, 0
        %273 = vmatpush.bf16.msra.mxu0 0
        %274 = vmatpush.bf16.msra.mxu0 0
        %275 = vmatpush.bf16.msra.mxu0 0
        %276 = vmatpush.bf16.msra.mxu0 0
        %277 = vmatpush.bf16.msra.mxu0 0
        %278 = vmatpush.bf16.msra.mxu0 0
        %279 = vmatpush.bf16.msra.mxu0 0
        %280 = vmatpush.bf16.msra.mxu0 %v271
        %281 = vmatmul.bf16.gmra.mxu0 %v268
        %v282 = vpop.f32.mrf.mxu0
        %v283 = vadd.f32 0.0, %v282
        %v284 = vpop.f32.mrf.mxu0
        %285 = vdwg.mxu0
        %v286 = vpack.c.bf16 %v283, %v283
        %vm287 = vcmask 125952
        %288 = vst.msk [vmem:[#allocation3] sm:$0xf] %vm287, %v286
        %v289 = vld [vmem:[#allocation2] sm:$0xf]
        %v290 = vld [vmem:[#allocation2 + $0x4] sm:$0xf]
        %v292 = vunpack.c.l.b16 %v289
        %v293 = vpack.c.b16 %v292, %v292
        %294 = vrot.lane.b32.xlu0 %v293, 112
        %v295 = vpop.permute.xlu0 %294
        %296 = vrot.lane.b32.xlu0 %v293, 48
        %v297 = vpop.permute.xlu0 %296
        %v299 = vsel %vm234, %v295, 0
        %v302 = vsel %vm234, %v297, 0
        %304 = vmatpush.bf16.xpose.msra.mxu0 0
        %305 = vmatpush.bf16.xpose.msra.mxu0 0
        %306 = vmatpush.bf16.xpose.msra.mxu0 0
        %307 = vmatpush.bf16.xpose.msra.mxu0 0
        %308 = vmatpush.bf16.xpose.msra.mxu0 0
        %309 = vmatpush.bf16.xpose.msra.mxu0 0
        %310 = vmatpush.bf16.xpose.msra.mxu0 0
        %311 = vmatpush.bf16.xpose.msra.mxu0 %v302
        %312 = vmatmul.bf16.gmra.mxu0 %v299
        %v313 = vpop.f32.mrf.mxu0
        %v314 = vadd.f32 0.0, %v313
        %v315 = vpop.f32.mrf.mxu0
        %316 = vdwg.mxu0
        %v317 = vsel %vm254, %v314, -inf
        %318 = vmax.xlane.f32.xlu0 %v317
        %v319 = vpop.xlane.xlu0 %318
        %v320 = vsub.f32 %v314, %v319
        %v321 = vmul.f32 %v320, 1.442695
        %v322 = vpow.pop %v321
        %v323 = vsel %vm254, %v322, 0.0
        %324 = vadd.xlane.f32.xlu0 %v323
        %v325 = vpop.xlane.xlu0 %324
        %v326 = vrcp.pop %v325
        %v327 = vmul.f32 %v322, %v326
        %v328 = vpack.c.bf16 %v327, %v327
        %v330 = vunpack.c.l.b16 %v290
        %v331 = vpack.c.b16 %v330, %v330
        %332 = vrot.lane.b32.xlu0 %v331, 112
        %v333 = vpop.permute.xlu0 %332
        %v335 = vsel %vm254, %v328, 0
        %v338 = vsel %vm223, %v333, 0
        %340 = vmatpush.bf16.msra.mxu0 0
        %341 = vmatpush.bf16.msra.mxu0 0
        %342 = vmatpush.bf16.msra.mxu0 0
        %343 = vmatpush.bf16.msra.mxu0 0
        %344 = vmatpush.bf16.msra.mxu0 0
        %345 = vmatpush.bf16.msra.mxu0 0
        %346 = vmatpush.bf16.msra.mxu0 0
        %347 = vmatpush.bf16.msra.mxu0 %v338
        %348 = vmatmul.bf16.gmra.mxu0 %v335
        %v349 = vpop.f32.mrf.mxu0
        %v350 = vadd.f32 0.0, %v349
        %v351 = vpop.f32.mrf.mxu0
        %352 = vdwg.mxu0
        %v353 = vpack.c.bf16 %v350, %v350
        %355 = vrot.lane.b32.xlu0 %v353, 16
        %v356 = vpop.permute.xlu0 %355
        %vm358 = vcmask 257152
        %359 = vst.msk [vmem:[#allocation3] sm:$0xf] %vm358, %v356
        %v360 = vld [vmem:[#allocation2] sm:$0xf]
        %v361 = vld [vmem:[#allocation2 + $0x4] sm:$0xf]
        %v363 = vunpack.c.l.b16 %v360
        %v364 = vpack.c.b16 %v363, %v363
        %365 = vrot.lane.b32.xlu0 %v364, 96
        %v366 = vpop.permute.xlu0 %365
        %367 = vrot.lane.b32.xlu0 %v364, 32
        %v368 = vpop.permute.xlu0 %367
        %v370 = vsel %vm234, %v366, 0
        %v373 = vsel %vm234, %v368, 0
        %375 = vmatpush.bf16.xpose.msra.mxu0 0
        %376 = vmatpush.bf16.xpose.msra.mxu0 0
        %377 = vmatpush.bf16.xpose.msra.mxu0 0
        %378 = vmatpush.bf16.xpose.msra.mxu0 0
        %379 = vmatpush.bf16.xpose.msra.mxu0 0
        %380 = vmatpush.bf16.xpose.msra.mxu0 0
        %381 = vmatpush.bf16.xpose.msra.mxu0 0
        %382 = vmatpush.bf16.xpose.msra.mxu0 %v373
        %383 = vmatmul.bf16.gmra.mxu0 %v370
        %v384 = vpop.f32.mrf.mxu0
        %v385 = vadd.f32 0.0, %v384
        %v386 = vpop.f32.mrf.mxu0
        %387 = vdwg.mxu0
        %v388 = vsel %vm254, %v385, -inf
        %389 = vmax.xlane.f32.xlu0 %v388
        %v390 = vpop.xlane.xlu0 %389
        %v391 = vsub.f32 %v385, %v390
        %v392 = vmul.f32 %v391, 1.442695
        %v393 = vpow.pop %v392
        %v394 = vsel %vm254, %v393, 0.0
        %395 = vadd.xlane.f32.xlu0 %v394
        %v396 = vpop.xlane.xlu0 %395
        %v397 = vrcp.pop %v396
        %v398 = vmul.f32 %v393, %v397
        %v399 = vpack.c.bf16 %v398, %v398
        %v401 = vunpack.c.l.b16 %v361
        %v402 = vpack.c.b16 %v401, %v401
        %403 = vrot.lane.b32.xlu0 %v402, 96
        %v404 = vpop.permute.xlu0 %403
        %v406 = vsel %vm254, %v399, 0
        %v409 = vsel %vm223, %v404, 0
        %411 = vmatpush.bf16.msra.mxu0 0
        %412 = vmatpush.bf16.msra.mxu0 0
        %413 = vmatpush.bf16.msra.mxu0 0
        %414 = vmatpush.bf16.msra.mxu0 0
        %415 = vmatpush.bf16.msra.mxu0 0
        %416 = vmatpush.bf16.msra.mxu0 0
        %417 = vmatpush.bf16.msra.mxu0 0
        %418 = vmatpush.bf16.msra.mxu0 %v409
        %419 = vmatmul.bf16.gmra.mxu0 %v406
        %v420 = vpop.f32.mrf.mxu0
        %v421 = vadd.f32 0.0, %v420
        %v422 = vpop.f32.mrf.mxu0
        %423 = vdwg.mxu0
        %v424 = vpack.c.bf16 %v421, %v421
        %426 = vrot.lane.b32.xlu0 %v424, 32
        %v427 = vpop.permute.xlu0 %426
        %vm429 = vcmask 388352
        %430 = vst.msk [vmem:[#allocation3] sm:$0xf] %vm429, %v427
        %v431 = vld [vmem:[#allocation2] sm:$0xf]
        %v432 = vld [vmem:[#allocation2 + $0x4] sm:$0xf]
        %v434 = vunpack.c.l.b16 %v431
        %v435 = vpack.c.b16 %v434, %v434
        %436 = vrot.lane.b32.xlu0 %v435, 80
        %v437 = vpop.permute.xlu0 %436
        %438 = vrot.lane.b32.xlu0 %v435, 16
        %v439 = vpop.permute.xlu0 %438
        %v441 = vsel %vm234, %v437, 0
        %v444 = vsel %vm234, %v439, 0
        %446 = vmatpush.bf16.xpose.msra.mxu0 0
        %447 = vmatpush.bf16.xpose.msra.mxu0 0
        %448 = vmatpush.bf16.xpose.msra.mxu0 0
        %449 = vmatpush.bf16.xpose.msra.mxu0 0
        %450 = vmatpush.bf16.xpose.msra.mxu0 0
        %451 = vmatpush.bf16.xpose.msra.mxu0 0
        %452 = vmatpush.bf16.xpose.msra.mxu0 0
        %453 = vmatpush.bf16.xpose.msra.mxu0 %v444
        %454 = vmatmul.bf16.gmra.mxu0 %v441
        %v455 = vpop.f32.mrf.mxu0
        %v456 = vadd.f32 0.0, %v455
        %v457 = vpop.f32.mrf.mxu0
        %458 = vdwg.mxu0
        %v459 = vsel %vm254, %v456, -inf
        %460 = vmax.xlane.f32.xlu0 %v459
        %v461 = vpop.xlane.xlu0 %460
        %v462 = vsub.f32 %v456, %v461
        %v463 = vmul.f32 %v462, 1.442695
        %v464 = vpow.pop %v463
        %v465 = vsel %vm254, %v464, 0.0
        %466 = vadd.xlane.f32.xlu0 %v465
        %v467 = vpop.xlane.xlu0 %466
        %v468 = vrcp.pop %v467
        %v469 = vmul.f32 %v464, %v468
        %v470 = vpack.c.bf16 %v469, %v469
        %v472 = vunpack.c.l.b16 %v432
        %v473 = vpack.c.b16 %v472, %v472
        %474 = vrot.lane.b32.xlu0 %v473, 80
        %v475 = vpop.permute.xlu0 %474
        %v477 = vsel %vm254, %v470, 0
        %v480 = vsel %vm223, %v475, 0
        %482 = vmatpush.bf16.msra.mxu0 0
        %483 = vmatpush.bf16.msra.mxu0 0
        %484 = vmatpush.bf16.msra.mxu0 0
        %485 = vmatpush.bf16.msra.mxu0 0
        %486 = vmatpush.bf16.msra.mxu0 0
        %487 = vmatpush.bf16.msra.mxu0 0
        %488 = vmatpush.bf16.msra.mxu0 0
        %489 = vmatpush.bf16.msra.mxu0 %v480
        %490 = vmatmul.bf16.gmra.mxu0 %v477
        %v491 = vpop.f32.mrf.mxu0
        %v492 = vadd.f32 0.0, %v491
        %v493 = vpop.f32.mrf.mxu0
        %494 = vdwg.mxu0
        %v495 = vpack.c.bf16 %v492, %v492
        %497 = vrot.lane.b32.xlu0 %v495, 48
        %v498 = vpop.permute.xlu0 %497
        %vm500 = vcmask 519552
        %501 = vst.msk [vmem:[#allocation3] sm:$0xf] %vm500, %v498
        %v502 = vld [vmem:[#allocation3] sm:$0xf]
        %v503 = vld [vmem:[%s2] sm:$0xf]
        %v504 = vld [vmem:[%s2 + $0x4] sm:$0xf]
        %v505 = vld [vmem:[%s2 + $0x8] sm:$0xf]
        %v506 = vld [vmem:[%s2 + $0xc] sm:$0xf]
        %v507 = vld [vmem:[%s2 + $0x10] sm:$0xf]
        %v508 = vld [vmem:[%s2 + $0x14] sm:$0xf]
        %v509 = vld [vmem:[%s2 + $0x18] sm:$0xf]
        %v510 = vld [vmem:[%s2 + $0x1c] sm:$0xf]
        %v519 = vunpack.c.l.b16 %v503
        %v520 = vunpack.c.l.b16 %v504
        %v521 = vunpack.c.l.b16 %v505
        %v522 = vunpack.c.l.b16 %v506
        %v523 = vunpack.c.l.b16 %v507
        %v524 = vunpack.c.l.b16 %v508
        %v525 = vunpack.c.l.b16 %v509
        %v526 = vunpack.c.l.b16 %v510
        %v527 = vpack.c.b16 %v520, %v519
        %v528 = vpack.c.b16 %v522, %v521
        %v529 = vpack.c.b16 %v524, %v523
        %v530 = vpack.c.b16 %v526, %v525
        %vm535 = vcmask 523264
        %v537 = vsel %vm535, %v502, 0
        %539 = vmatpush.bf16.msra.mxu0 0
        %540 = vmatpush.bf16.msra.mxu0 0
        %541 = vmatpush.bf16.msra.mxu0 0
        %542 = vmatpush.bf16.msra.mxu0 0
        %543 = vmatpush.bf16.msra.mxu0 %v530
        %544 = vmatpush.bf16.msra.mxu0 %v529
        %545 = vmatpush.bf16.msra.mxu0 %v528
        %546 = vmatpush.bf16.msra.mxu0 %v527
        %547 = vmatmul.bf16.gmra.mxu0 %v537
        %v548 = vpop.f32.mrf.mxu0
        %v549 = vadd.f32 0.0, %v548
        %v550 = vpop.f32.mrf.mxu0
        %551 = vdwg.mxu0
        %552 = vst.msk [vmem:[%s161] sm:$0xff] %vm192, %v549
        %s553 = sand.u32 %s93, 1
        %s554 = scalar_lea.sflag [#allocation5], %s553
        %s555 = sand.u32 %s93, 1
        %s556 = smul.addr %s555, 8
        %s557 = scalar_lea.vmem [#allocation4], %s556
        // Predicated region
        $region33: #{tpu_custom_call.1} parent=31 // pred_check
          %p558 = pneg %p103
        $region34: #{tpu_custom_call.1} parent=31 // pred_check_branch
          %560 = sbr.rel (%p558) target = $region36
        $region35: #{tpu_custom_call.1} parent=31 // pred_region
          %562 = vsyncadd %s554, 0
          %s563 = smul.addr %s17, 8
          %s564 = scalar_lea.hbm %s3, %s563
          %s566 = sshll.u32 %s557, 4
          %s567 = int_to_ptr.vmem [resolvable:$true] %s566
          %s568 = sshll.u32 %s564, 4
          %s569 = int_to_ptr.hbm [resolvable:$true] %s568
          %571 = dma.vmem_to_hbm [thread:$0]  %s567, 128, %s569, %s554
        $region36: #{tpu_custom_call.1} parent=31 // pred_fallthru
          _
      $region32: #{tpu_custom_call.1} parent=5 // pred_fallthru
        _
      %p572 = scmp.le.s32.totalorder 2, %s12
      // Predicated region
      $region37: #{tpu_custom_call.1} parent=5 // pred_check
        %p573 = pneg %p572
      $region38: #{tpu_custom_call.1} parent=5 // pred_check_branch
        %575 = sbr.rel (%p573) target = $region40
      $region39: #{tpu_custom_call.1} parent=5 // pred_region
        %s576 = ssub.s32 %s12, 2
        // Predicated region
        $region41: #{tpu_custom_call.1} parent=39 // pred_check
          %p577 = pneg %p109
        $region42: #{tpu_custom_call.1} parent=39 // pred_check_branch
          %579 = sbr.rel (%p577) target = $region44
        $region43: #{tpu_custom_call.1} parent=39 // pred_region
          %s580 = sand.u32 %s94, 1
          %s581 = scalar_lea.sflag [#allocation5], %s580
          %s582 = sand.u32 %s94, 1
          %s583 = smul.addr %s582, 8
          %s584 = scalar_lea.vmem [#allocation4], %s583
          %586 = dma.done %s581, 128
        $region44: #{tpu_custom_call.1} parent=39 // pred_fallthru
          _
      $region40: #{tpu_custom_call.1} parent=5 // pred_fallthru
        _
    $region6: #{tpu_custom_call.1} parent=1 // loop_footer
      %s16 = sadd.s32 1, %s12
    $region7: #{tpu_custom_call.1} parent=1 // loop_footer_branch
      %11 = sbr.rel target = $region3
    $region8: #{tpu_custom_call.1} parent=1 // loop_exit
      _
    %587 = vsyncpa [#allocation5], 1
    %s588 = scalar_lea.sflag [#allocation5], 1
    %589 = vsyncpa %s588, 1

</llo_original>
